<compile_context>
chip_gen: v7x
topology: tpu7x:2x2x1
jax: 0.10.0
libtpu: 0.0.40
codegen_flags: <defaults>
</compile_context>

<pallas_src>
import math
import numpy as np
import jax
import jax.numpy as jnp
from jax import lax
from jax.experimental import pallas as pl
from jax.experimental.pallas import tpu as pltpu

# small config consistent with the module's forward
BATCH = 2
SEQ = 8
DIM = 256          # feature dim (normalized axis)
EPS = 1e-6


def _rmsnorm_kernel(x_ref, w_ref, o_ref):
    # x_ref: (block_rows, D), w_ref: (1, D), o_ref: (block_rows, D)
    x = x_ref[...].astype(jnp.float32)                     # torch: x.float()
    ms = jnp.mean(x * x, axis=-1, keepdims=True)           # XLU lane reduce
    inv = lax.rsqrt(ms + EPS)                              # EUP rsqrt
    normed = (x * inv).astype(o_ref.dtype)                 # torch: .type_as(x)
    o_ref[...] = normed * w_ref[...].astype(o_ref.dtype)   # * weight


def rmsnorm_pallas(x, weight):
    """RMSNorm over the last axis of `x`, matching the PyTorch module."""
    orig_shape = x.shape
    D = orig_shape[-1]
    rows = math.prod(orig_shape[:-1])

    x2 = x.reshape(rows, D)      # fold batch/seq into the row dim (lane-dense slab)
    w2 = weight.reshape(1, D)

    # Single VMEM-resident block for small problems; 512-row tiles otherwise.
    block_rows = rows if rows <= 512 else 512
    grid = (pl.cdiv(rows, block_rows),)

    out = pl.pallas_call(
        _rmsnorm_kernel,
        out_shape=jax.ShapeDtypeStruct((rows, D), x.dtype),
        grid_spec=pltpu.PrefetchScalarGridSpec(
            num_scalar_prefetch=0,
            grid=grid,
            in_specs=[
                pl.BlockSpec((block_rows, D), lambda i: (i, 0)),   # activations
                pl.BlockSpec((1, D), lambda i: (0, 0)),            # weight row (shared)
            ],
            out_specs=pl.BlockSpec((block_rows, D), lambda i: (i, 0)),
        ),
        compiler_params=pltpu.CompilerParams(
            dimension_semantics=("parallel",)),   # independent row blocks
    )(x2, w2)
    return out.reshape(orig_shape)


# ----------------- pure-JAX reference (mirrors the torch code) -----------------
def rmsnorm_reference(x, weight, eps=EPS):
    xf = x.astype(jnp.float32)
    inv = lax.rsqrt(jnp.mean(xf * xf, axis=-1, keepdims=True) + eps)
    return (xf * inv).astype(x.dtype) * weight


if __name__ == "__main__":
    key = jax.random.PRNGKey(0)
    k1, k2 = jax.random.split(key)

    x = jax.random.normal(k1, (BATCH, SEQ, DIM), jnp.float32)
    # The module initializes weight to ones; use a non-trivial weight so the
    # final elementwise scale is actually exercised.
    weight = 1.0 + 0.1 * jax.random.normal(k2, (DIM,), jnp.float32)

    out = rmsnorm_pallas(x, weight)
    out = jax.block_until_ready(out)

    ref = rmsnorm_reference(x, weight)
    np.testing.assert_allclose(np.asarray(out), np.asarray(ref), rtol=1e-5, atol=1e-5)

    print("KERNEL_OK")
</pallas_src>

<mosaic_0001>
module attributes {stable_mosaic.version = 11 : i64} {
  func.func @_rmsnorm_kernel(%arg0: i32, %arg1: memref<16x256xf32, #tpu.memory_space<vmem>>, %arg2: memref<1x256xf32, #tpu.memory_space<vmem>>, %arg3: memref<16x256xf32, #tpu.memory_space<vmem>>) attributes {dimension_semantics = [#tpu.dimension_semantics<parallel>], iteration_bounds = array<i64: 1>, scalar_prefetch = 0 : i64, scratch_operands = 0 : i64, tpu.core_type = #tpu.core_type<tc>, window_params = [{transform_indices = @transform_0, window_bounds = array<i64: 16, 256>}, {pipeline_mode = #tpu.pipeline_mode<synchronous>, transform_indices = @transform_1, window_bounds = array<i64: 1, 256>}, {transform_indices = @transform_2, window_bounds = array<i64: 16, 256>}]} {
    %c0 = arith.constant 0 : index
    %c0_0 = arith.constant 0 : index
    %0 = vector.load %arg1[%c0, %c0_0] : memref<16x256xf32, #tpu.memory_space<vmem>>, vector<16x256xf32>
    %1 = arith.mulf %0, %0 : vector<16x256xf32>
    %cst = arith.constant dense<0.000000e+00> : vector<16xf32>
    %2 = vector.multi_reduction <add>, %1, %cst [1] : vector<16x256xf32> to vector<16xf32>
    %3 = vector.shape_cast %2 : vector<16xf32> to vector<16x1xf32>
    %cst_1 = arith.constant 2.560000e+02 : f32
    %4 = vector.broadcast %cst_1 : f32 to vector<16x1xf32>
    %5 = arith.divf %3, %4 : vector<16x1xf32>
    %cst_2 = arith.constant 9.99999997E-7 : f32
    %6 = vector.broadcast %cst_2 : f32 to vector<16x1xf32>
    %7 = arith.addf %5, %6 : vector<16x1xf32>
    %8 = math.rsqrt %7 : vector<16x1xf32>
    %9 = vector.broadcast %8 : vector<16x1xf32> to vector<16x256xf32>
    %10 = arith.mulf %0, %9 : vector<16x256xf32>
    %c0_3 = arith.constant 0 : index
    %c0_4 = arith.constant 0 : index
    %11 = vector.load %arg2[%c0_3, %c0_4] : memref<1x256xf32, #tpu.memory_space<vmem>>, vector<1x256xf32>
    %12 = vector.broadcast %11 : vector<1x256xf32> to vector<16x256xf32>
    %13 = arith.mulf %10, %12 : vector<16x256xf32>
    %c0_5 = arith.constant 0 : index
    %c0_6 = arith.constant 0 : index
    %14 = vector.load %arg3[%c0_5, %c0_6] : memref<16x256xf32, #tpu.memory_space<vmem>>, vector<16x256xf32>
    tpu.vector_store %arg3[%c0_5, %c0_6], %13 {strides = array<i32>} : memref<16x256xf32, #tpu.memory_space<vmem>>, vector<16x256xf32>,
    return
  }
  func.func @transform_0(%arg0: i32) -> (i32, i32) {
    %c0_i32 = arith.constant 0 : i32
    %c0_i32_0 = arith.constant 0 : i32
    return %arg0, %c0_i32 : i32, i32
  }
  func.func @transform_1(%arg0: i32) -> (i32, i32) {
    %c0_i32 = arith.constant 0 : i32
    %c0_i32_0 = arith.constant 0 : i32
    %c0_i32_1 = arith.constant 0 : i32
    return %c0_i32, %c0_i32_0 : i32, i32
  }
  func.func @transform_2(%arg0: i32) -> (i32, i32) {
    %c0_i32 = arith.constant 0 : i32
    %c0_i32_0 = arith.constant 0 : i32
    return %arg0, %c0_i32 : i32, i32
  }
}

</mosaic_0001>

<llo_original>
// kernel: tpu_custom_call.1
$region0: #{tpu_custom_call.1}
  #allocation0 [shape = 'u32[]', space=smem, size = 0x4, offset = 0x4, fixed_abs, tag = 'smem constant byte address 0x4 - core index']
  #allocation1 [shape = 'u32[144,128]{1,0:T(1,128)}', space=vmem, size = 0x12000, scoped, tag = 'internal scratch']
  %s0 = inlined_call_operand.hbm [shape: f32[16,256], index: 0, kind: input, shape index: {}]
  %s1 = inlined_call_operand.vmem [shape: f32[1,256], index: 1, kind: input, shape index: {}]
  %s2 = inlined_call_operand.hbm [shape: f32[16,256], index: 2, kind: output, shape index: {}]
  %s3 = sld [smem:[#allocation0]]
  $region22: #{tpu_custom_call.1} parent=0
    _
  %s5 = ssub.s32 1, %s3
  %s6 = scalar_select 0, %s5, %s3
  $region1: #{tpu_custom_call.1} parent=0
    #allocation2 [shape = 'u8[16384]{0}', space=vmem, size = 0x4000, scoped, tag = 'input window, operand 0, single buffered']
    #allocation3 [shape = 's32[1]{0}', space=sflag, size = 0x4, scoped, tag = 'scoped memory for tpu_custom_call.1']
    #allocation4 [shape = 's32[1]{0}', space=sflag, size = 0x4, scoped, tag = 'scoped memory for tpu_custom_call.1']
    #allocation5 [shape = 'u8[16384]{0}', space=vmem, size = 0x4000, scoped, tag = 'output window, operand 0, single buffered']
    %7 = vsyncpa [#allocation3], 0
    %8 = vsyncpa [#allocation4], 0
    // Predicated region
    $region2: #{tpu_custom_call.1} parent=1 // pred_check
      _
    $region3: #{tpu_custom_call.1} parent=1 // pred_check_branch
      %10 = sbr.rel (0) target = $region5
    $region4: #{tpu_custom_call.1} parent=1 // pred_region
      %s12 = ssub.s32 512, 512
      %13 = vsyncadd [#allocation3], %s12
      %s14 = sshll.u32 [#allocation2], 4
      %s15 = int_to_ptr.vmem [resolvable:$true] %s14
      %20 = dma.hbm_to_vmem [thread:$0]  %s0, 512, %s15, [#allocation3], 256, 256, 16
    $region5: #{tpu_custom_call.1} parent=1 // pred_fallthru
      _
    // Predicated region
    $region6: #{tpu_custom_call.1} parent=1 // pred_check
      _
    $region7: #{tpu_custom_call.1} parent=1 // pred_check_branch
      %22 = sbr.rel (0) target = $region9
    $region8: #{tpu_custom_call.1} parent=1 // pred_region
      _
    $region9: #{tpu_custom_call.1} parent=1 // pred_fallthru
      _
    // Predicated region
    $region10: #{tpu_custom_call.1} parent=1 // pred_check
      _
    $region11: #{tpu_custom_call.1} parent=1 // pred_check_branch
      %24 = sbr.rel (0) target = $region13
    $region12: #{tpu_custom_call.1} parent=1 // pred_region
      %25 = dma.done [#allocation3], 512
    $region13: #{tpu_custom_call.1} parent=1 // pred_fallthru
      _
    %v26 = vld [vmem:[#allocation2] sm:$0xff]
    %v27 = vld [vmem:[#allocation2 + $0x8] sm:$0xff]
    %v28 = vld [vmem:[#allocation2 + $0x10] sm:$0xff]
    %v29 = vld [vmem:[#allocation2 + $0x18] sm:$0xff]
    %v30 = vmul.f32 %v26, %v26
    %v31 = vmul.f32 %v27, %v27
    %v32 = vmul.f32 %v28, %v28
    %v33 = vmul.f32 %v29, %v29
    %v34 = vadd.f32 %v30, %v31
    %35 = vadd.xlane.f32.xlu0 %v34
    %v36 = vpop.xlane.xlu0 %35
    %v37 = vadd.f32 %v32, %v33
    %38 = vadd.xlane.f32.xlu0 %v37
    %v39 = vpop.xlane.xlu0 %38
    %v40 = vrcp.pop 256.0
    %v41 = vmul.f32 %v36, %v40
    %v42 = vmul.f32 %v39, %v40
    %v43 = vadd.f32 %v41, 1e-06
    %v44 = vadd.f32 %v42, 1e-06
    %v45 = vrsqrt.pop %v43
    %v46 = vrsqrt.pop %v44
    %v47 = vmul.f32 %v26, %v45
    %v48 = vmul.f32 %v27, %v45
    %v49 = vmul.f32 %v28, %v46
    %v50 = vmul.f32 %v29, %v46
    %v51 = vld [vmem:[%s1] sm:$0x3]
    %v53 = vlaneseq
    %v54 = vshrl.u32 %v53, 7
    %v55 = vsub.s32 0, %v54
    %v56 = vrot.slane %v51, %v55
    %v57 = vlaneseq
    %v58 = vshrl.u32 %v57, 7
    %v59 = vsub.s32 1, %v58
    %v60 = vrot.slane %v51, %v59
    %v63 = vmul.f32 %v47, %v56
    %v64 = vmul.f32 %v48, %v60
    %v65 = vmul.f32 %v49, %v56
    %v66 = vmul.f32 %v50, %v60
    %67 = vst [vmem:[#allocation5] sm:$0xff] %v63
    %68 = vst [vmem:[#allocation5 + $0x8] sm:$0xff] %v64
    %69 = vst [vmem:[#allocation5 + $0x10] sm:$0xff] %v65
    %70 = vst [vmem:[#allocation5 + $0x18] sm:$0xff] %v66
    // Predicated region
    $region14: #{tpu_custom_call.1} parent=1 // pred_check
      _
    $region15: #{tpu_custom_call.1} parent=1 // pred_check_branch
      %72 = sbr.rel (0) target = $region17
    $region16: #{tpu_custom_call.1} parent=1 // pred_region
      %s74 = ssub.s32 512, 512
      %75 = vsyncadd [#allocation4], %s74
      %s76 = sshll.u32 [#allocation5], 4
      %s77 = int_to_ptr.vmem [resolvable:$true] %s76
      %82 = dma.vmem_to_hbm [thread:$0]  %s77, 512, %s2, [#allocation4], 256, 256, 16
    $region17: #{tpu_custom_call.1} parent=1 // pred_fallthru
      _
    // Predicated region
    $region18: #{tpu_custom_call.1} parent=1 // pred_check
      _
    $region19: #{tpu_custom_call.1} parent=1 // pred_check_branch
      %84 = sbr.rel (0) target = $region21
    $region20: #{tpu_custom_call.1} parent=1 // pred_region
      %85 = dma.done [#allocation4], 512
    $region21: #{tpu_custom_call.1} parent=1 // pred_fallthru
      _
    %86 = vsyncpa [#allocation3], 1
    %87 = vsyncpa [#allocation4], 1

</llo_original>
